<compile_context>
chip_gen: v7x
topology: tpu7x:2x2x1
jax: 0.10.0
libtpu: 0.0.40
codegen_flags: <defaults>
</compile_context>

<pallas_src>
import functools

import jax
import jax.numpy as jnp
from jax.experimental import pallas as pl
from jax.experimental.pallas import tpu as pltpu

HIDDEN = 64
LANE = 128
ALIGN = 16            # batch-tile row alignment
NEG_BIG = -1.0e30     # pad-logit bias: exp underflows to exactly 0, never NaN


def _round_up(x, m):
    return (x + m - 1) // m * m


def _cdiv(a, b):
    return (a + b - 1) // b


def _default_bf16_activations():
    """bf16 VPU/EUP path exists on v6e / v7x; keep f32 activations elsewhere."""
    try:
        kind = jax.devices()[0].device_kind.lower()
    except Exception:
        return False
    return any(tag in kind for tag in ("v6", "v7", "7x"))


def actor_kernel(x_ref, w1_ref, b1_ref, w2_ref, b2_ref, w3_ref, b3_ref, o_ref,
                 *, act_dtype, action_dim):
    # x_ref: [TB, state_dim] f32 ; w*: bf16 ; b*: f32 ; o_ref: [TB, action_dim] f32
    x = x_ref[...].astype(jnp.bfloat16)          # in-kernel cast (free VPU filler)

    # fc1 + tanh   (bf16 MXU operands, f32 accumulate)
    a1 = jnp.dot(x, w1_ref[...], preferred_element_type=jnp.float32) + b1_ref[...]
    h1 = jnp.tanh(a1.astype(act_dtype))

    # fc2 + tanh
    a2 = jnp.dot(h1.astype(jnp.bfloat16), w2_ref[...],
                 preferred_element_type=jnp.float32) + b2_ref[...]
    h2 = jnp.tanh(a2.astype(act_dtype))

    # fc3 -- lane-padded (128) for the MXU; padded bias columns are NEG_BIG so
    # their softmax weight underflows to exactly 0.
    logits = jnp.dot(h2.astype(jnp.bfloat16), w3_ref[...],
                     preferred_element_type=jnp.float32) + b3_ref[...]

    # numerically stable softmax in f32; exact divide so rows sum to 1.
    m = jnp.max(logits, axis=-1, keepdims=True)
    e = jnp.exp(logits - m)
    denom = jnp.sum(e, axis=-1, keepdims=True)
    probs = e / denom

    # store only the real action columns (narrow HBM writeback)
    o_ref[...] = probs[:, :action_dim].astype(o_ref.dtype)


def actor_forward(x, params, *, block_b=2048, bf16_activations=None):
    """x: [B, state_dim] float. Returns softmax action probs [B, action_dim] f32."""
    B, state_dim = x.shape
    action_dim = params["w3"].shape[1]
    pad_a = _round_up(max(action_dim, LANE), LANE)

    if bf16_activations is None:
        bf16_activations = _default_bf16_activations()
    act_dtype = jnp.bfloat16 if bf16_activations else jnp.float32

    # --- batch tiling -------------------------------------------------------
    tb = min(block_b, _round_up(B, ALIGN))
    # keep >=2 grid steps when the batch allows it (v7x has 2 TensorCores)
    tb = min(tb, max(ALIGN, _round_up(_cdiv(B, 2), ALIGN)))
    tb = _round_up(tb, ALIGN)
    b_pad = _round_up(B, tb)
    grid = (b_pad // tb,)

    # --- host-side prep (cheap, remainder-pad only) --------------------------
    x_in = x.astype(jnp.float32)
    if b_pad != B:
        x_in = jnp.pad(x_in, ((0, b_pad - B), (0, 0)))

    w1 = params["w1"].astype(jnp.bfloat16)
    w2 = params["w2"].astype(jnp.bfloat16)
    w3 = jnp.pad(params["w3"], ((0, 0), (0, pad_a - action_dim))).astype(jnp.bfloat16)
    b1 = params["b1"].astype(jnp.float32).reshape(1, -1)
    b2 = params["b2"].astype(jnp.float32).reshape(1, -1)
    b3 = jnp.pad(params["b3"].astype(jnp.float32).reshape(1, -1),
                 ((0, 0), (0, pad_a - action_dim)), constant_values=NEG_BIG)

    # weights / biases: full blocks, constant index_map -> VMEM resident.
    def resident(a):
        return pl.BlockSpec(a.shape, lambda i: (0, 0), memory_space=pltpu.VMEM)

    # --- VMEM / cost bookkeeping ---------------------------------------------
    in_cols = _round_up(state_dim, LANE)
    io_bytes = 2 * tb * (in_cols + LANE) * 4          # double-buffered x / out
    scratch_bytes = 10 * tb * LANE * 4                # intermediates headroom
    vmem_limit = int(min(64 * 2**20, max(32 * 2**20, io_bytes + scratch_bytes)))

    flops = 2 * b_pad * (state_dim * HIDDEN + HIDDEN * HIDDEN + HIDDEN * pad_a)
    transcendentals = b_pad * (2 * HIDDEN + pad_a)
    bytes_accessed = (x_in.size * 4
                      + (w1.size + w2.size + w3.size) * 2
                      + (b1.size + b2.size + b3.size) * 4
                      + b_pad * action_dim * 4)

    kernel = functools.partial(actor_kernel, act_dtype=act_dtype,
                               action_dim=action_dim)

    out = pl.pallas_call(
        kernel,
        out_shape=jax.ShapeDtypeStruct((b_pad, action_dim), jnp.float32),
        grid=grid,
        in_specs=[
            pl.BlockSpec((tb, state_dim), lambda i: (i, 0),
                         memory_space=pltpu.VMEM),
            resident(w1), resident(b1),
            resident(w2), resident(b2),
            resident(w3), resident(b3),
        ],
        out_specs=pl.BlockSpec((tb, action_dim), lambda i: (i, 0),
                               memory_space=pltpu.VMEM),
        compiler_params=pltpu.CompilerParams(
            dimension_semantics=("parallel",),
            vmem_limit_bytes=vmem_limit,
        ),
        cost_estimate=pl.CostEstimate(flops=flops,
                                      transcendentals=transcendentals,
                                      bytes_accessed=bytes_accessed),
    )(x_in, w1, b1, w2, b2, w3, b3)

    return out[:B] if b_pad != B else out


def init_params(key, state_dim, action_dim, hidden=HIDDEN):
    """Deterministic init matching PyTorch nn.Linear default:
    U(-1/sqrt(fan_in), 1/sqrt(fan_in)) for both weights and biases."""
    ks = jax.random.split(key, 6)

    def linear(kw, kb, fan_in, fan_out):
        bound = 1.0 / jnp.sqrt(jnp.float32(fan_in))
        w = jax.random.uniform(kw, (fan_in, fan_out), jnp.float32, -bound, bound)
        b = jax.random.uniform(kb, (1, fan_out), jnp.float32, -bound, bound)
        return w, b

    w1, b1 = linear(ks[0], ks[1], state_dim, hidden)
    w2, b2 = linear(ks[2], ks[3], hidden, hidden)
    w3, b3 = linear(ks[4], ks[5], hidden, action_dim)
    return {"w1": w1, "b1": b1, "w2": w2, "b2": b2, "w3": w3, "b3": b3}


def actor_forward_ref_matched(x, p, *, bf16_activations=False):
    """Reference matching kernel numerics (bf16 MXU operands, f32 accumulate,
    activations in the kernel's activation dtype)."""
    bf = jnp.bfloat16
    act = bf if bf16_activations else jnp.float32
    a1 = jnp.dot(x.astype(jnp.float32).astype(bf), p["w1"].astype(bf),
                 preferred_element_type=jnp.float32) + p["b1"]
    h1 = jnp.tanh(a1.astype(act))
    a2 = jnp.dot(h1.astype(bf), p["w2"].astype(bf),
                 preferred_element_type=jnp.float32) + p["b2"]
    h2 = jnp.tanh(a2.astype(act))
    logits = jnp.dot(h2.astype(bf), p["w3"].astype(bf),
                     preferred_element_type=jnp.float32) + p["b3"]
    return jax.nn.softmax(logits.astype(jnp.float32), axis=-1)


def actor_forward_ref_f32(x, p):
    """Pure-f32 reference (original module semantics)."""
    h1 = jnp.tanh(x @ p["w1"] + p["b1"])
    h2 = jnp.tanh(h1 @ p["w2"] + p["b2"])
    logits = h2 @ p["w3"] + p["b3"]
    return jax.nn.softmax(logits, axis=-1)


if __name__ == "__main__":
    key = jax.random.PRNGKey(0)
    k_param, k_x, k_x2 = jax.random.split(key, 3)

    state_dim, action_dim = 16, 8
    params = init_params(k_param, state_dim, action_dim, hidden=HIDDEN)

    use_bf16_act = _default_bf16_activations()
    tol = 2e-2 if use_bf16_act else 5e-3

    # small case (single grid step, B=8)
    B = 8
    x = jax.random.normal(k_x, (B, state_dim), jnp.float32)
    out = jax.block_until_ready(
        actor_forward(x, params, bf16_activations=use_bf16_act))
    ref = actor_forward_ref_matched(x, params, bf16_activations=use_bf16_act)
    ref32 = actor_forward_ref_f32(x, params)
    assert out.shape == (B, action_dim)
    assert bool(jnp.all(jnp.isfinite(out)))
    assert jnp.allclose(jnp.sum(out, axis=-1), 1.0, atol=1e-3)
    assert jnp.allclose(out, ref, atol=tol, rtol=tol)
    assert jnp.allclose(out, ref32, atol=5e-2, rtol=5e-2)

    # larger case: multi-step grid + batch remainder (B=200, tb=64 -> grid=(4,))
    B2 = 200
    x2 = jax.random.normal(k_x2, (B2, state_dim), jnp.float32)
    out2 = jax.block_until_ready(
        actor_forward(x2, params, block_b=64, bf16_activations=use_bf16_act))
    ref2 = actor_forward_ref_matched(x2, params, bf16_activations=use_bf16_act)
    assert out2.shape == (B2, action_dim)
    assert bool(jnp.all(jnp.isfinite(out2)))
    assert jnp.allclose(jnp.sum(out2, axis=-1), 1.0, atol=1e-3)
    assert jnp.allclose(out2, ref2, atol=tol, rtol=tol)

    # default (large) tile path: same results regardless of tiling
    out3 = jax.block_until_ready(
        actor_forward(x2, params, bf16_activations=use_bf16_act))
    assert out3.shape == (B2, action_dim)
    assert jnp.allclose(out3, out2, atol=1e-5, rtol=1e-5)

    # TODO(synk): Categorical sampling / log_prob in act()/act_all_probs() is
    # host-side distribution logic outside forward(); not implemented in kernel.
    print("KERNEL_OK")
</pallas_src>

<mosaic_0001>
module attributes {stable_mosaic.version = 11 : i64} {
  func.func @actor_kernel(%arg0: i32, %arg1: memref<16x16xf32, #tpu.memory_space<vmem>>, %arg2: memref<16x64xbf16, #tpu.memory_space<vmem>>, %arg3: memref<1x64xf32, #tpu.memory_space<vmem>>, %arg4: memref<64x64xbf16, #tpu.memory_space<vmem>>, %arg5: memref<1x64xf32, #tpu.memory_space<vmem>>, %arg6: memref<64x128xbf16, #tpu.memory_space<vmem>>, %arg7: memref<1x128xf32, #tpu.memory_space<vmem>>, %arg8: memref<16x8xf32, #tpu.memory_space<vmem>>) attributes {dimension_semantics = [#tpu.dimension_semantics<parallel>], iteration_bounds = array<i64: 1>, scalar_prefetch = 0 : i64, scratch_operands = 0 : i64, tpu.core_type = #tpu.core_type<tc>, window_params = [{transform_indices = @transform_0, window_bounds = array<i64: 16, 16>}, {pipeline_mode = #tpu.pipeline_mode<synchronous>, transform_indices = @transform_1, window_bounds = array<i64: 16, 64>}, {pipeline_mode = #tpu.pipeline_mode<synchronous>, transform_indices = @transform_2, window_bounds = array<i64: 1, 64>}, {pipeline_mode = #tpu.pipeline_mode<synchronous>, transform_indices = @transform_3, window_bounds = array<i64: 64, 64>}, {pipeline_mode = #tpu.pipeline_mode<synchronous>, transform_indices = @transform_4, window_bounds = array<i64: 1, 64>}, {pipeline_mode = #tpu.pipeline_mode<synchronous>, transform_indices = @transform_5, window_bounds = array<i64: 64, 128>}, {pipeline_mode = #tpu.pipeline_mode<synchronous>, transform_indices = @transform_6, window_bounds = array<i64: 1, 128>}, {transform_indices = @transform_7, window_bounds = array<i64: 16, 8>}]} {
    %c0 = arith.constant 0 : index
    %c0_0 = arith.constant 0 : index
    %0 = vector.load %arg1[%c0, %c0_0] : memref<16x16xf32, #tpu.memory_space<vmem>>, vector<16x16xf32>
    %1 = arith.truncf %0 : vector<16x16xf32> to vector<16x16xbf16>
    %c0_1 = arith.constant 0 : index
    %c0_2 = arith.constant 0 : index
    %2 = vector.load %arg2[%c0_1, %c0_2] : memref<16x64xbf16, #tpu.memory_space<vmem>>, vector<16x64xbf16>
    %cst = arith.constant dense<0.000000e+00> : vector<16x64xf32>
    %3 = tpu.matmul %1, %2, %cst {dimension_numbers = #tpu.dot_dimension_numbers<[1], [0], [0], [1], [0, 0, 1, 1], [], []>} : vector<16x16xbf16>, vector<16x64xbf16>, vector<16x64xf32> -> vector<16x64xf32>
    %c0_3 = arith.constant 0 : index
    %c0_4 = arith.constant 0 : index
    %4 = vector.load %arg3[%c0_3, %c0_4] : memref<1x64xf32, #tpu.memory_space<vmem>>, vector<1x64xf32>
    %5 = vector.broadcast %4 : vector<1x64xf32> to vector<16x64xf32>
    %6 = arith.addf %3, %5 : vector<16x64xf32>
    %7 = math.tanh %6 : vector<16x64xf32>
    %8 = arith.truncf %7 : vector<16x64xf32> to vector<16x64xbf16>
    %c0_5 = arith.constant 0 : index
    %c0_6 = arith.constant 0 : index
    %9 = vector.load %arg4[%c0_5, %c0_6] : memref<64x64xbf16, #tpu.memory_space<vmem>>, vector<64x64xbf16>
    %cst_7 = arith.constant dense<0.000000e+00> : vector<16x64xf32>
    %10 = tpu.matmul %8, %9, %cst_7 {dimension_numbers = #tpu.dot_dimension_numbers<[1], [0], [0], [1], [0, 0, 1, 1], [], []>} : vector<16x64xbf16>, vector<64x64xbf16>, vector<16x64xf32> -> vector<16x64xf32>
    %c0_8 = arith.constant 0 : index
    %c0_9 = arith.constant 0 : index
    %11 = vector.load %arg5[%c0_8, %c0_9] : memref<1x64xf32, #tpu.memory_space<vmem>>, vector<1x64xf32>
    %12 = vector.broadcast %11 : vector<1x64xf32> to vector<16x64xf32>
    %13 = arith.addf %10, %12 : vector<16x64xf32>
    %14 = math.tanh %13 : vector<16x64xf32>
    %15 = arith.truncf %14 : vector<16x64xf32> to vector<16x64xbf16>
    %c0_10 = arith.constant 0 : index
    %c0_11 = arith.constant 0 : index
    %16 = vector.load %arg6[%c0_10, %c0_11] : memref<64x128xbf16, #tpu.memory_space<vmem>>, vector<64x128xbf16>
    %cst_12 = arith.constant dense<0.000000e+00> : vector<16x128xf32>
    %17 = tpu.matmul %15, %16, %cst_12 {dimension_numbers = #tpu.dot_dimension_numbers<[1], [0], [0], [1], [0, 0, 1, 1], [], []>} : vector<16x64xbf16>, vector<64x128xbf16>, vector<16x128xf32> -> vector<16x128xf32>
    %c0_13 = arith.constant 0 : index
    %c0_14 = arith.constant 0 : index
    %18 = vector.load %arg7[%c0_13, %c0_14] : memref<1x128xf32, #tpu.memory_space<vmem>>, vector<1x128xf32>
    %19 = vector.broadcast %18 : vector<1x128xf32> to vector<16x128xf32>
    %20 = arith.addf %17, %19 : vector<16x128xf32>
    %cst_15 = arith.constant dense<0xFF800000> : vector<16xf32>
    %21 = vector.multi_reduction <maximumf>, %20, %cst_15 [1] : vector<16x128xf32> to vector<16xf32>
    %22 = vector.shape_cast %21 : vector<16xf32> to vector<16x1xf32>
    %23 = vector.broadcast %22 : vector<16x1xf32> to vector<16x128xf32>
    %24 = arith.subf %20, %23 : vector<16x128xf32>
    %25 = math.exp %24 : vector<16x128xf32>
    %cst_16 = arith.constant dense<0.000000e+00> : vector<16xf32>
    %26 = vector.multi_reduction <add>, %25, %cst_16 [1] : vector<16x128xf32> to vector<16xf32>
    %27 = vector.shape_cast %26 : vector<16xf32> to vector<16x1xf32>
    %28 = vector.broadcast %27 : vector<16x1xf32> to vector<16x128xf32>
    %29 = arith.divf %25, %28 : vector<16x128xf32>
    %30 = vector.extract_strided_slice %29 {offsets = [0, 0], sizes = [16, 8], strides = [1, 1]} : vector<16x128xf32> to vector<16x8xf32>
    %c0_17 = arith.constant 0 : index
    %c0_18 = arith.constant 0 : index
    %31 = vector.load %arg8[%c0_17, %c0_18] : memref<16x8xf32, #tpu.memory_space<vmem>>, vector<16x8xf32>
    tpu.vector_store %arg8[%c0_17, %c0_18], %30 {strides = array<i32>} : memref<16x8xf32, #tpu.memory_space<vmem>>, vector<16x8xf32>,
    return
  }
  func.func @transform_0(%arg0: i32) -> (i32, i32) {
    %c0_i32 = arith.constant 0 : i32
    %c0_i32_0 = arith.constant 0 : i32
    return %arg0, %c0_i32 : i32, i32
  }
  func.func @transform_1(%arg0: i32) -> (i32, i32) {
    %c0_i32 = arith.constant 0 : i32
    %c0_i32_0 = arith.constant 0 : i32
    %c0_i32_1 = arith.constant 0 : i32
    return %c0_i32, %c0_i32_0 : i32, i32
  }
  func.func @transform_2(%arg0: i32) -> (i32, i32) {
    %c0_i32 = arith.constant 0 : i32
    %c0_i32_0 = arith.constant 0 : i32
    %c0_i32_1 = arith.constant 0 : i32
    return %c0_i32, %c0_i32_0 : i32, i32
  }
  func.func @transform_3(%arg0: i32) -> (i32, i32) {
    %c0_i32 = arith.constant 0 : i32
    %c0_i32_0 = arith.constant 0 : i32
    %c0_i32_1 = arith.constant 0 : i32
    return %c0_i32, %c0_i32_0 : i32, i32
  }
  func.func @transform_4(%arg0: i32) -> (i32, i32) {
    %c0_i32 = arith.constant 0 : i32
    %c0_i32_0 = arith.constant 0 : i32
    %c0_i32_1 = arith.constant 0 : i32
    return %c0_i32, %c0_i32_0 : i32, i32
  }
  func.func @transform_5(%arg0: i32) -> (i32, i32) {
    %c0_i32 = arith.constant 0 : i32
    %c0_i32_0 = arith.constant 0 : i32
    %c0_i32_1 = arith.constant 0 : i32
    return %c0_i32, %c0_i32_0 : i32, i32
  }
  func.func @transform_6(%arg0: i32) -> (i32, i32) {
    %c0_i32 = arith.constant 0 : i32
    %c0_i32_0 = arith.constant 0 : i32
    %c0_i32_1 = arith.constant 0 : i32
    return %c0_i32, %c0_i32_0 : i32, i32
  }
  func.func @transform_7(%arg0: i32) -> (i32, i32) {
    %c0_i32 = arith.constant 0 : i32
    %c0_i32_0 = arith.constant 0 : i32
    return %arg0, %c0_i32 : i32, i32
  }
}

</mosaic_0001>

<llo_original>
// kernel: tpu_custom_call.1
$region0: #{tpu_custom_call.1}
  #allocation0 [shape = 'u32[]', space=smem, size = 0x4, offset = 0x4, fixed_abs, tag = 'smem constant byte address 0x4 - core index']
  #allocation1 [shape = 'u32[144,128]{1,0:T(1,128)}', space=vmem, size = 0x12000, scoped, tag = 'internal scratch']
  %s0 = inlined_call_operand.hbm [shape: f32[16,16], index: 0, kind: input, shape index: {}]
  %s1 = inlined_call_operand.hbm [shape: bf16[16,64], index: 1, kind: input, shape index: {}]
  %s2 = inlined_call_operand.vmem [shape: f32[1,64], index: 2, kind: input, shape index: {}]
  %s3 = inlined_call_operand.hbm [shape: bf16[64,64], index: 3, kind: input, shape index: {}]
  %s4 = inlined_call_operand.vmem [shape: f32[1,64], index: 4, kind: input, shape index: {}]
  %s5 = inlined_call_operand.hbm [shape: bf16[64,128], index: 5, kind: input, shape index: {}]
  %s6 = inlined_call_operand.vmem [shape: f32[1,128], index: 6, kind: input, shape index: {}]
  %s7 = inlined_call_operand.vmem [shape: f32[16,8], index: 7, kind: output, shape index: {}]
  %s8 = sld [smem:[#allocation0]]
  $region54: #{tpu_custom_call.1} parent=0
    _
  %s10 = ssub.s32 1, %s8
  %s11 = scalar_select 0, %s10, %s8
  $region1: #{tpu_custom_call.1} parent=0
    #allocation2 [shape = 'u8[8192]{0}', space=vmem, size = 0x2000, scoped, tag = 'input window, operand 0, single buffered']
    #allocation3 [shape = 's32[1]{0}', space=sflag, size = 0x4, scoped, tag = 'scoped memory for tpu_custom_call.1']
    #allocation4 [shape = 'u8[4096]{0}', space=vmem, size = 0x1000, scoped, tag = 'input window, operand 1, single buffered']
    #allocation5 [shape = 's32[1]{0}', space=sflag, size = 0x4, scoped, tag = 'scoped memory for tpu_custom_call.1']
    #allocation6 [shape = 'u8[16384]{0}', space=vmem, size = 0x4000, scoped, tag = 'input window, operand 3, single buffered']
    #allocation7 [shape = 'u8[16384]{0}', space=vmem, size = 0x4000, scoped, tag = 'input window, operand 5, single buffered']
    #allocation8 [shape = 's32[1]{0}', space=sflag, size = 0x4, scoped, tag = 'scoped memory for tpu_custom_call.1']
    %12 = vsyncpa [#allocation3], 0
    %13 = vsyncpa [#allocation5], 0
    %14 = vsyncpa [#allocation8], 0
    // Predicated region
    $region2: #{tpu_custom_call.1} parent=1 // pred_check
      _
    $region3: #{tpu_custom_call.1} parent=1 // pred_check_branch
      %16 = sbr.rel (0) target = $region5
    $region4: #{tpu_custom_call.1} parent=1 // pred_region
      %s18 = ssub.s32 256, 256
      %19 = vsyncadd [#allocation3], %s18
      %s20 = sshll.u32 [#allocation2], 4
      %s21 = int_to_ptr.vmem [resolvable:$true] %s20
      %26 = dma.hbm_to_vmem [thread:$0]  %s0, 256, %s21, [#allocation3], 128, 128, 8
    $region5: #{tpu_custom_call.1} parent=1 // pred_fallthru
      _
    // Predicated region
    $region6: #{tpu_custom_call.1} parent=1 // pred_check
      _
    $region7: #{tpu_custom_call.1} parent=1 // pred_check_branch
      %28 = sbr.rel (0) target = $region9
    $region8: #{tpu_custom_call.1} parent=1 // pred_region
      %s30 = ssub.s32 128, 128
      %31 = vsyncadd [#allocation5], %s30
      %s32 = sshll.u32 [#allocation4], 4
      %s33 = int_to_ptr.vmem [resolvable:$true] %s32
      %38 = dma.hbm_to_vmem [thread:$0]  %s1, 128, %s33, [#allocation5], 64, 64, 4
    $region9: #{tpu_custom_call.1} parent=1 // pred_fallthru
      _
    // Predicated region
    $region10: #{tpu_custom_call.1} parent=1 // pred_check
      _
    $region11: #{tpu_custom_call.1} parent=1 // pred_check_branch
      %40 = sbr.rel (0) target = $region13
    $region12: #{tpu_custom_call.1} parent=1 // pred_region
      _
    $region13: #{tpu_custom_call.1} parent=1 // pred_fallthru
      _
    // Predicated region
    $region14: #{tpu_custom_call.1} parent=1 // pred_check
      _
    $region15: #{tpu_custom_call.1} parent=1 // pred_check_branch
      %42 = sbr.rel (0) target = $region17
    $region16: #{tpu_custom_call.1} parent=1 // pred_region
      %s44 = ssub.s32 512, 512
      %45 = vsyncadd [#allocation5], %s44
      %s46 = sshll.u32 [#allocation6], 4
      %s47 = int_to_ptr.vmem [resolvable:$true] %s46
      %52 = dma.hbm_to_vmem [thread:$0]  %s3, 512, %s47, [#allocation5], 64, 64, 4
    $region17: #{tpu_custom_call.1} parent=1 // pred_fallthru
      _
    // Predicated region
    $region18: #{tpu_custom_call.1} parent=1 // pred_check
      _
    $region19: #{tpu_custom_call.1} parent=1 // pred_check_branch
      %54 = sbr.rel (0) target = $region21
    $region20: #{tpu_custom_call.1} parent=1 // pred_region
      _
    $region21: #{tpu_custom_call.1} parent=1 // pred_fallthru
      _
    // Predicated region
    $region22: #{tpu_custom_call.1} parent=1 // pred_check
      _
    $region23: #{tpu_custom_call.1} parent=1 // pred_check_branch
      %56 = sbr.rel (0) target = $region25
    $region24: #{tpu_custom_call.1} parent=1 // pred_region
      %s58 = ssub.s32 512, 512
      %59 = vsyncadd [#allocation8], %s58
      %s60 = sshll.u32 [#allocation7], 4
      %s61 = int_to_ptr.vmem [resolvable:$true] %s60
      %66 = dma.hbm_to_vmem [thread:$0]  %s5, 512, %s61, [#allocation8], 64, 64, 4
    $region25: #{tpu_custom_call.1} parent=1 // pred_fallthru
      _
    // Predicated region
    $region26: #{tpu_custom_call.1} parent=1 // pred_check
      _
    $region27: #{tpu_custom_call.1} parent=1 // pred_check_branch
      %68 = sbr.rel (0) target = $region29
    $region28: #{tpu_custom_call.1} parent=1 // pred_region
      _
    $region29: #{tpu_custom_call.1} parent=1 // pred_fallthru
      _
    // Predicated region
    $region30: #{tpu_custom_call.1} parent=1 // pred_check
      _
    $region31: #{tpu_custom_call.1} parent=1 // pred_check_branch
      %70 = sbr.rel (0) target = $region33
    $region32: #{tpu_custom_call.1} parent=1 // pred_region
      %71 = dma.done [#allocation3], 256
    $region33: #{tpu_custom_call.1} parent=1 // pred_fallthru
      _
    // Predicated region
    $region34: #{tpu_custom_call.1} parent=1 // pred_check
      _
    $region35: #{tpu_custom_call.1} parent=1 // pred_check_branch
      %73 = sbr.rel (0) target = $region37
    $region36: #{tpu_custom_call.1} parent=1 // pred_region
      %74 = dma.done [#allocation5], 128
    $region37: #{tpu_custom_call.1} parent=1 // pred_fallthru
      _
    // Predicated region
    $region38: #{tpu_custom_call.1} parent=1 // pred_check
      _
    $region39: #{tpu_custom_call.1} parent=1 // pred_check_branch
      %76 = sbr.rel (0) target = $region41
    $region40: #{tpu_custom_call.1} parent=1 // pred_region
      %77 = dma.done [#allocation5], 512
    $region41: #{tpu_custom_call.1} parent=1 // pred_fallthru
      _
    // Predicated region
    $region42: #{tpu_custom_call.1} parent=1 // pred_check
      _
    $region43: #{tpu_custom_call.1} parent=1 // pred_check_branch
      %79 = sbr.rel (0) target = $region45
    $region44: #{tpu_custom_call.1} parent=1 // pred_region
      %80 = dma.done [#allocation8], 512
    $region45: #{tpu_custom_call.1} parent=1 // pred_fallthru
      _
    %v82 = vld [vmem:[#allocation2] sm:$0xff]
    %v83 = vld [vmem:[#allocation2 + $0x8] sm:$0xff]
    %v84 = vpack.c.bf16 %v83, %v82
    %v85 = vld [vmem:[#allocation4] sm:$0xf]
    %v86 = vld [vmem:[#allocation4 + $0x4] sm:$0xf]
    %v87 = vld [vmem:[%s2] sm:$0x1]
    %v89 = vlaneseq
    %v90 = vshrl.u32 %v89, 7
    %v91 = vsub.s32 0, %v90
    %v92 = vrot.slane %v87, %v91
    %v96 = vunpack.c.l.b16 %v85
    %v97 = vunpack.c.l.b16 %v86
    %v98 = vpack.c.b16 %v97, %v96
    %vm100 = vcmask 130048
    %v102 = vsel %vm100, %v84, 0
    %104 = vmatprep.subr.bf16.mxu0 0
    %105 = vmatpush1.bf16.msra.mxu0 %v98
    %106 = vmatprep.subr.bf16.mxu0 0
    %107 = vmatpush1.bf16.msra.mxu0 0
    %108 = vmatprep.subr.bf16.mxu0 0
    %109 = vmatpush1.bf16.msra.mxu0 0
    %110 = vmatprep.subr.bf16.mxu0 0
    %111 = vmatpush1.bf16.msra.mxu0 0
    %112 = vmatprep.subr.bf16.mxu0 0
    %113 = vmatpush1.bf16.msra.mxu0 0
    %114 = vmatprep.subr.bf16.mxu0 0
    %115 = vmatpush1.bf16.msra.mxu0 0
    %116 = vmatprep.subr.bf16.mxu0 0
    %117 = vmatpush1.bf16.msra.mxu0 0
    %118 = vmatprep.subr.bf16.mxu0 0
    %119 = vmatpush1.bf16.msra.mxu0 0
    %120 = vmatprep.subr.bf16.mxu0 0
    %121 = vmatpush1.bf16.msra.mxu0 0
    %122 = vmatprep.subr.bf16.mxu0 0
    %123 = vmatpush1.bf16.msra.mxu0 0
    %124 = vmatprep.subr.bf16.mxu0 0
    %125 = vmatpush1.bf16.msra.mxu0 0
    %126 = vmatprep.subr.bf16.mxu0 0
    %127 = vmatpush1.bf16.msra.mxu0 0
    %128 = vmatprep.subr.bf16.mxu0 0
    %129 = vmatpush1.bf16.msra.mxu0 0
    %130 = vmatprep.subr.bf16.mxu0 0
    %131 = vmatpush1.bf16.msra.mxu0 0
    %132 = vmatprep.subr.bf16.mxu0 0
    %133 = vmatpush1.bf16.msra.mxu0 0
    %134 = vmatprep.subr.bf16.mxu0 0
    %135 = vmatpush1.bf16.msra.mxu0 0
    %136 = vmatprep.mubr.bf16.mxu0 0
    %137 = vmatmul.mubr.bf16.gmra.mrb[0].mxu0 %v102
    %v138 = vpop.f32.mrb[0].mxu0
    %v139 = vadd.f32 %v92, %v138
    %v140 = vpop.f32.mrb[0].mxu0
    %v141 = vpop.f32.mrb[0].mxu0
    %v142 = vadd.f32 %v92, %v141
    %v143 = vpop.f32.mrb[0].mxu0
    %144 = vdwg.mxu0
    %v145 = vtanh.pop %v139
    %v146 = vtanh.pop %v142
    %v147 = vpack.c.bf16 %v146, %v145
    %v148 = vld [vmem:[#allocation6] sm:$0xf]
    %v149 = vld [vmem:[#allocation6 + $0x4] sm:$0xf]
    %v150 = vld [vmem:[#allocation6 + $0x8] sm:$0xf]
    %v151 = vld [vmem:[#allocation6 + $0xc] sm:$0xf]
    %v152 = vld [vmem:[#allocation6 + $0x10] sm:$0xf]
    %v153 = vld [vmem:[#allocation6 + $0x14] sm:$0xf]
    %v154 = vld [vmem:[#allocation6 + $0x18] sm:$0xf]
    %v155 = vld [vmem:[#allocation6 + $0x1c] sm:$0xf]
    %v156 = vld [vmem:[%s4] sm:$0x1]
    %v158 = vlaneseq
    %v159 = vshrl.u32 %v158, 7
    %v160 = vsub.s32 0, %v159
    %v161 = vrot.slane %v156, %v160
    %v171 = vunpack.c.l.b16 %v148
    %v172 = vunpack.c.l.b16 %v149
    %v173 = vunpack.c.l.b16 %v150
    %v174 = vunpack.c.l.b16 %v151
    %v175 = vunpack.c.l.b16 %v152
    %v176 = vunpack.c.l.b16 %v153
    %v177 = vunpack.c.l.b16 %v154
    %v178 = vunpack.c.l.b16 %v155
    %v179 = vpack.c.b16 %v172, %v171
    %v180 = vpack.c.b16 %v174, %v173
    %v181 = vpack.c.b16 %v176, %v175
    %v182 = vpack.c.b16 %v178, %v177
    %vm187 = vcmask 523264
    %v189 = vsel %vm187, %v147, 0
    %191 = vmatprep.subr.bf16.mxu0 0
    %192 = vmatpush1.bf16.msra.mxu0 %v179
    %193 = vmatprep.subr.bf16.mxu0 0
    %194 = vmatpush1.bf16.msra.mxu0 %v180
    %195 = vmatprep.subr.bf16.mxu0 0
    %196 = vmatpush1.bf16.msra.mxu0 %v181
    %197 = vmatprep.subr.bf16.mxu0 0
    %198 = vmatpush1.bf16.msra.mxu0 %v182
    %199 = vmatprep.subr.bf16.mxu0 0
    %200 = vmatpush1.bf16.msra.mxu0 0
    %201 = vmatprep.subr.bf16.mxu0 0
    %202 = vmatpush1.bf16.msra.mxu0 0
    %203 = vmatprep.subr.bf16.mxu0 0
    %204 = vmatpush1.bf16.msra.mxu0 0
    %205 = vmatprep.subr.bf16.mxu0 0
    %206 = vmatpush1.bf16.msra.mxu0 0
    %207 = vmatprep.subr.bf16.mxu0 0
    %208 = vmatpush1.bf16.msra.mxu0 0
    %209 = vmatprep.subr.bf16.mxu0 0
    %210 = vmatpush1.bf16.msra.mxu0 0
    %211 = vmatprep.subr.bf16.mxu0 0
    %212 = vmatpush1.bf16.msra.mxu0 0
    %213 = vmatprep.subr.bf16.mxu0 0
    %214 = vmatpush1.bf16.msra.mxu0 0
    %215 = vmatprep.subr.bf16.mxu0 0
    %216 = vmatpush1.bf16.msra.mxu0 0
    %217 = vmatprep.subr.bf16.mxu0 0
    %218 = vmatpush1.bf16.msra.mxu0 0
    %219 = vmatprep.subr.bf16.mxu0 0
    %220 = vmatpush1.bf16.msra.mxu0 0
    %221 = vmatprep.subr.bf16.mxu0 0
    %222 = vmatpush1.bf16.msra.mxu0 0
    %223 = vmatprep.mubr.bf16.mxu0 0
    %224 = vmatmul.mubr.bf16.gmra.mrb[0].mxu0 %v189
    %v225 = vpop.f32.mrb[0].mxu0
    %v226 = vadd.f32 %v161, %v225
    %v227 = vpop.f32.mrb[0].mxu0
    %v228 = vpop.f32.mrb[0].mxu0
    %v229 = vadd.f32 %v161, %v228
    %v230 = vpop.f32.mrb[0].mxu0
    %231 = vdwg.mxu0
    %v232 = vtanh.pop %v226
    %v233 = vtanh.pop %v229
    %v234 = vpack.c.bf16 %v233, %v232
    %v235 = vld [vmem:[#allocation7] sm:$0xf]
    %v236 = vld [vmem:[#allocation7 + $0x4] sm:$0xf]
    %v237 = vld [vmem:[#allocation7 + $0x8] sm:$0xf]
    %v238 = vld [vmem:[#allocation7 + $0xc] sm:$0xf]
    %v239 = vld [vmem:[#allocation7 + $0x10] sm:$0xf]
    %v240 = vld [vmem:[#allocation7 + $0x14] sm:$0xf]
    %v241 = vld [vmem:[#allocation7 + $0x18] sm:$0xf]
    %v242 = vld [vmem:[#allocation7 + $0x1c] sm:$0xf]
    %v243 = vld [vmem:[%s6] sm:$0x1]
    %v245 = vlaneseq
    %v246 = vshrl.u32 %v245, 7
    %v247 = vsub.s32 0, %v246
    %v248 = vrot.slane %v243, %v247
    %v258 = vunpack.c.l.b16 %v235
    %v259 = vunpack.c.l.b16 %v236
    %v260 = vunpack.c.l.b16 %v237
    %v261 = vunpack.c.l.b16 %v238
    %v262 = vunpack.c.l.b16 %v239
    %v263 = vunpack.c.l.b16 %v240
    %v264 = vunpack.c.l.b16 %v241
    %v265 = vunpack.c.l.b16 %v242
    %v266 = vpack.c.b16 %v259, %v258
    %v267 = vpack.c.b16 %v261, %v260
    %v268 = vpack.c.b16 %v263, %v262
    %v269 = vpack.c.b16 %v265, %v264
    %v275 = vsel %vm187, %v234, 0
    %277 = vmatprep.subr.bf16.mxu0 0
    %278 = vmatpush1.bf16.msra.mxu0 %v266
    %279 = vmatprep.subr.bf16.mxu0 0
    %280 = vmatpush1.bf16.msra.mxu0 %v267
    %281 = vmatprep.subr.bf16.mxu0 0
    %282 = vmatpush1.bf16.msra.mxu0 %v268
    %283 = vmatprep.subr.bf16.mxu0 0
    %284 = vmatpush1.bf16.msra.mxu0 %v269
    %285 = vmatprep.subr.bf16.mxu0 0
    %286 = vmatpush1.bf16.msra.mxu0 0
    %287 = vmatprep.subr.bf16.mxu0 0
    %288 = vmatpush1.bf16.msra.mxu0 0
    %289 = vmatprep.subr.bf16.mxu0 0
    %290 = vmatpush1.bf16.msra.mxu0 0
    %291 = vmatprep.subr.bf16.mxu0 0
    %292 = vmatpush1.bf16.msra.mxu0 0
    %293 = vmatprep.subr.bf16.mxu0 0
    %294 = vmatpush1.bf16.msra.mxu0 0
    %295 = vmatprep.subr.bf16.mxu0 0
    %296 = vmatpush1.bf16.msra.mxu0 0
    %297 = vmatprep.subr.bf16.mxu0 0
    %298 = vmatpush1.bf16.msra.mxu0 0
    %299 = vmatprep.subr.bf16.mxu0 0
    %300 = vmatpush1.bf16.msra.mxu0 0
    %301 = vmatprep.subr.bf16.mxu0 0
    %302 = vmatpush1.bf16.msra.mxu0 0
    %303 = vmatprep.subr.bf16.mxu0 0
    %304 = vmatpush1.bf16.msra.mxu0 0
    %305 = vmatprep.subr.bf16.mxu0 0
    %306 = vmatpush1.bf16.msra.mxu0 0
    %307 = vmatprep.subr.bf16.mxu0 0
    %308 = vmatpush1.bf16.msra.mxu0 0
    %309 = vmatprep.mubr.bf16.mxu0 0
    %310 = vmatmul.mubr.bf16.gmra.mrb[0].mxu0 %v275
    %v311 = vpop.f32.mrb[0].mxu0
    %v312 = vadd.f32 %v248, %v311
    %v313 = vpop.f32.mrb[0].mxu0
    %v314 = vpop.f32.mrb[0].mxu0
    %v315 = vadd.f32 %v248, %v314
    %v316 = vpop.f32.mrb[0].mxu0
    %317 = vdwg.mxu0
    %318 = vmax.xlane.f32.xlu0 %v312
    %v319 = vpop.xlane.xlu0 %318
    %320 = vmax.xlane.f32.xlu0 %v315
    %v321 = vpop.xlane.xlu0 %320
    %v322 = vsub.f32 %v312, %v319
    %v323 = vsub.f32 %v315, %v321
    %v324 = vmul.f32 %v322, 1.442695
    %v325 = vpow.pop %v324
    %v326 = vmul.f32 %v323, 1.442695
    %v327 = vpow.pop %v326
    %328 = vadd.xlane.f32.xlu0 %v325
    %v329 = vpop.xlane.xlu0 %328
    %330 = vadd.xlane.f32.xlu0 %v327
    %v331 = vpop.xlane.xlu0 %330
    %v332 = vrcp.pop %v329
    %v333 = vmul.f32 %v325, %v332
    %v334 = vrcp.pop %v331
    %v335 = vmul.f32 %v327, %v334
    %vm336 = vcmask 64512
    %337 = vst.msk [vmem:[%s7] sm:$0xff] %vm336, %v333
    %338 = vst.msk [vmem:[%s7 + $0x8] sm:$0xff] %vm336, %v335
    // Predicated region
    $region46: #{tpu_custom_call.1} parent=1 // pred_check
      _
    $region47: #{tpu_custom_call.1} parent=1 // pred_check_branch
      %340 = sbr.rel (0) target = $region49
    $region48: #{tpu_custom_call.1} parent=1 // pred_region
      _
    $region49: #{tpu_custom_call.1} parent=1 // pred_fallthru
      _
    // Predicated region
    $region50: #{tpu_custom_call.1} parent=1 // pred_check
      _
    $region51: #{tpu_custom_call.1} parent=1 // pred_check_branch
      %342 = sbr.rel (0) target = $region53
    $region52: #{tpu_custom_call.1} parent=1 // pred_region
      _
    $region53: #{tpu_custom_call.1} parent=1 // pred_fallthru
      _
    %343 = vsyncpa [#allocation3], 1
    %344 = vsyncpa [#allocation5], 1
    %345 = vsyncpa [#allocation8], 1

</llo_original>
